<compile_context>
chip_gen: v5e
topology: v5e:2x2
jax: 0.10.0
libtpu: 0.0.40
codegen_flags: <defaults>
</compile_context>

<pallas_src>
import math

import jax
import jax.numpy as jnp
from jax.experimental import pallas as pl
from jax.experimental.pallas import tpu as pltpu


# ---------------------------------------------------------------------------
# helpers
# ---------------------------------------------------------------------------
def _pick_block(total, target, multiples=(8,)):
    """Largest block <= target that divides `total` and is a multiple of one of
    `multiples` (tried in order); falls back to the full dimension."""
    if total <= target:
        return total
    for m in multiples:
        for cand in range(min(target, total), m - 1, -1):
            if cand % m == 0 and total % cand == 0:
                return cand
    return total


def _vmem_capacity_bytes():
    """Physical VMEM (128 MiB on v5e/v6e, 64 MiB on v7x); safe fallback."""
    try:
        return int(pltpu.get_tpu_info().vmem_capacity_bytes)
    except Exception:
        return 64 * 1024 * 1024


# ---------------------------------------------------------------------------
# Stage 1: fused Q/K/V projection, head-split output layout (3, B, H, S, d_k)
# ---------------------------------------------------------------------------
def _qkv_proj_kernel(x_ref, w_ref, b_ref, o_ref):
    # x: (1,1,tr,D) bf16   w: (1,1,D,dk) bf16   b: (1,1,1,dk) f32
    y = jnp.dot(x_ref[0, 0], w_ref[0, 0],
                preferred_element_type=jnp.float32) + b_ref[0, 0]
    o_ref[0, 0, 0] = y.astype(o_ref.dtype)


def _qkv_projection(x, w, b, *, block_rows=512):
    """x: (3,B,S,D) bf16, w: (3,H,D,dk) bf16, b: (3,H,1,dk) f32
    -> (3,B,H,S,dk) bf16 (attention-ready layout, no XLA transpose)."""
    P, B, S, D = x.shape
    _, H, _, dk = w.shape
    tr = _pick_block(S, block_rows, (16, 8))
    grid = (P, B, S // tr, H)   # H innermost: activation tile stays resident
    return pl.pallas_call(
        _qkv_proj_kernel,
        out_shape=jax.ShapeDtypeStruct((P, B, H, S, dk), jnp.bfloat16),
        grid_spec=pltpu.PrefetchScalarGridSpec(
            num_scalar_prefetch=0,
            grid=grid,
            in_specs=[
                pl.BlockSpec((1, 1, tr, D), lambda p, bb, r, h: (p, bb, r, 0)),
                pl.BlockSpec((1, 1, D, dk), lambda p, bb, r, h: (p, h, 0, 0)),
                pl.BlockSpec((1, 1, 1, dk), lambda p, bb, r, h: (p, h, 0, 0)),
            ],
            out_specs=pl.BlockSpec((1, 1, 1, tr, dk),
                                   lambda p, bb, r, h: (p, bb, h, r, 0)),
        ),
        compiler_params=pltpu.CompilerParams(
            dimension_semantics=("parallel", "parallel", "parallel", "arbitrary"),
            vmem_limit_bytes=32 * 1024 * 1024),
    )(x, w, b)


# ---------------------------------------------------------------------------
# Stage 2: flash attention (heads batched, online softmax, masked-tile skip)
# ---------------------------------------------------------------------------
def _flash_body(kvs_ref, bias_ref, q_ref, k_ref, v_ref, out_ref, scores_ref,
                m_ref, l_ref, acc_ref):
    b = pl.program_id(0)
    qi = pl.program_id(1)
    kv_i = pl.program_id(2)
    n_kv = kvs_ref[b, qi]   # number of leading kv tiles with any unmasked entry

    @pl.when(kv_i == 0)
    def _init():
        m_ref[...] = jnp.full(m_ref.shape, -jnp.inf, jnp.float32)
        l_ref[...] = jnp.zeros(l_ref.shape, jnp.float32)
        acc_ref[...] = jnp.zeros(acc_ref.shape, jnp.float32)

    @pl.when(kv_i < n_kv)   # skip fully-masked kv tiles (no MXU / exp work)
    def _compute():
        q = q_ref[0, 0]      # (H, tq, dk)  bf16, pre-scaled by 1/sqrt(dk)
        k = k_ref[0, 0]      # (H, tkv, dk) bf16
        v = v_ref[0, 0]      # (H, tkv, dk) bf16

        # scores for all heads at once: (H, tq, tkv), f32 accumulation on MXU.
        s = jax.lax.dot_general(q, k, (((2,), (2,)), ((0,), (0,))),
                                preferred_element_type=jnp.float32)
        # precomputed additive mask bias (bf16), broadcast over heads.
        s = s + bias_ref[0].astype(jnp.float32)

        m_prev = m_ref[...]                                  # (H, tq, 1)
        m_new = jnp.maximum(m_prev, jnp.max(s, axis=-1, keepdims=True))
        alpha = jnp.exp(m_prev - m_new)
        p = jnp.exp(s - m_new)                               # (H, tq, tkv)
        p_sum = jnp.sum(p, axis=-1, keepdims=True)

        l_ref[...] = alpha * l_ref[...] + p_sum
        acc_ref[...] = alpha * acc_ref[...] + jax.lax.dot_general(
            p.astype(jnp.bfloat16), v, (((2,), (1,)), ((0,), (0,))),
            preferred_element_type=jnp.float32)
        m_ref[...] = m_new

        if scores_ref is not None:
            # Only exact with a single kv tile (enforced by the wrapper).
            scores_ref[0] = (p * pl.reciprocal(p_sum, approx=False)
                             ).astype(scores_ref.dtype)

    @pl.when(kv_i == n_kv - 1)
    def _finalize():
        inv_l = pl.reciprocal(l_ref[...], approx=False)   # once per q tile: exact
        out_ref[0] = (acc_ref[...] * inv_l).astype(out_ref.dtype)


def _flash_kernel(kvs_ref, bias_ref, q_ref, k_ref, v_ref, out_ref,
                  m_ref, l_ref, acc_ref):
    _flash_body(kvs_ref, bias_ref, q_ref, k_ref, v_ref, out_ref, None,
                m_ref, l_ref, acc_ref)


def _flash_kernel_scores(kvs_ref, bias_ref, q_ref, k_ref, v_ref, out_ref,
                         scores_ref, m_ref, l_ref, acc_ref):
    _flash_body(kvs_ref, bias_ref, q_ref, k_ref, v_ref, out_ref, scores_ref,
                m_ref, l_ref, acc_ref)


def _flash_attention(qkvh, mask, *, block_q, block_kv, return_scores,
                     vmem_limit):
    """qkvh: (3, B, H, S, dk) bf16 (Q pre-scaled); mask: (B, S, S) integer."""
    _, B, H, S, dk = qkvh.shape
    tq = _pick_block(S, block_q, (16, 8))
    # tkv is the lane dim of the bias / scores tiles -> keep it a 128-multiple.
    # TODO(synk): returning normalized probabilities with multiple KV tiles
    # would need a rescale pass; the debug path uses one KV tile.
    tkv = S if return_scores else _pick_block(S, block_kv, (128,))
    nq, nkv = S // tq, S // tkv
    grid = (B, nq, nkv)

    # masked_fill(-1e20) folded into a bf16 additive bias (2x less HBM than
    # the int32 mask; computed once in XLA).
    bias = jnp.where(mask == 0, jnp.float32(-1e20),
                     jnp.float32(0.0)).astype(jnp.bfloat16)

    # Per (batch, q-tile): number of leading kv tiles containing at least one
    # unmasked element.  Tiles beyond that are skipped (clamped index -> no
    # new DMA; pl.when -> no compute).  For causal masks this halves stage 2.
    valid = (mask != 0).reshape(B, nq, tq, nkv, tkv).any(axis=(2, 4))   # (B,nq,nkv)
    kv_steps = jnp.maximum(
        jnp.max(jnp.where(valid, jnp.arange(1, nkv + 1, dtype=jnp.int32), 0),
                axis=-1),
        1).astype(jnp.int32)                                            # (B, nq)

    def kv_block(kvi, b, qi, kvs):
        return jnp.minimum(kvi, kvs[b, qi] - 1)

    in_specs = [
        pl.BlockSpec((1, tq, tkv),
                     lambda b, qi, kvi, kvs: (b, qi, kv_block(kvi, b, qi, kvs))),
        pl.BlockSpec((1, 1, H, tq, dk),
                     lambda b, qi, kvi, kvs: (0, b, 0, qi, 0)),
        pl.BlockSpec((1, 1, H, tkv, dk),
                     lambda b, qi, kvi, kvs: (1, b, 0, kv_block(kvi, b, qi, kvs), 0)),
        pl.BlockSpec((1, 1, H, tkv, dk),
                     lambda b, qi, kvi, kvs: (2, b, 0, kv_block(kvi, b, qi, kvs), 0)),
    ]
    ctx_shape = jax.ShapeDtypeStruct((B, H, S, dk), jnp.bfloat16)
    ctx_spec = pl.BlockSpec((1, H, tq, dk), lambda b, qi, kvi, kvs: (b, 0, qi, 0))

    if return_scores:
        out_shape = (ctx_shape,
                     jax.ShapeDtypeStruct((B, H, S, S), jnp.bfloat16))
        out_specs = (ctx_spec,
                     pl.BlockSpec((1, H, tq, tkv),
                                  lambda b, qi, kvi, kvs: (b, 0, qi, kvi)))
        kernel = _flash_kernel_scores
    else:
        out_shape = ctx_shape
        out_specs = ctx_spec
        kernel = _flash_kernel

    scratch = [
        pltpu.VMEM((H, tq, 1), jnp.float32),    # running max
        pltpu.VMEM((H, tq, 1), jnp.float32),    # running denom
        pltpu.VMEM((H, tq, dk), jnp.float32),   # context accumulator
    ]

    res = pl.pallas_call(
        kernel,
        out_shape=out_shape,
        grid_spec=pltpu.PrefetchScalarGridSpec(
            num_scalar_prefetch=1,
            grid=grid,
            in_specs=in_specs,
            out_specs=out_specs,
            scratch_shapes=scratch),
        compiler_params=pltpu.CompilerParams(
            dimension_semantics=("parallel", "parallel", "arbitrary"),
            vmem_limit_bytes=vmem_limit),
    )(kv_steps, bias, qkvh, qkvh, qkvh)

    if return_scores:
        ctx, scores = res
        return ctx, scores
    return res, None


# ---------------------------------------------------------------------------
# Stage 3: output projection with fused head merge (H = reduction grid axis)
# ---------------------------------------------------------------------------
def _out_proj_kernel(ctx_ref, w_ref, b_ref, o_ref, acc_ref):
    h = pl.program_id(2)

    @pl.when(h == 0)
    def _init():
        acc_ref[...] = jnp.zeros(acc_ref.shape, jnp.float32)

    acc_ref[...] += jnp.dot(ctx_ref[0, 0], w_ref[0],
                            preferred_element_type=jnp.float32)

    @pl.when(h == pl.num_programs(2) - 1)
    def _finalize():
        o_ref[0] = (acc_ref[...] + b_ref[...]).astype(o_ref.dtype)


def _output_projection(ctx, w_h, bias, *, block_rows=256, out_dtype=jnp.float32):
    """ctx: (B,H,S,dk) bf16, w_h: (H,dk,D) bf16, bias: (1,D) f32 -> (B,S,D)."""
    B, H, S, dk = ctx.shape
    D = w_h.shape[-1]
    tr = _pick_block(S, block_rows, (16, 8))
    grid = (B, S // tr, H)
    return pl.pallas_call(
        _out_proj_kernel,
        out_shape=jax.ShapeDtypeStruct((B, S, D), out_dtype),
        grid_spec=pltpu.PrefetchScalarGridSpec(
            num_scalar_prefetch=0,
            grid=grid,
            in_specs=[
                pl.BlockSpec((1, 1, tr, dk), lambda b, r, h: (b, h, r, 0)),
                pl.BlockSpec((1, dk, D), lambda b, r, h: (h, 0, 0)),
                pl.BlockSpec((1, D), lambda b, r, h: (0, 0)),
            ],
            out_specs=pl.BlockSpec((1, tr, D), lambda b, r, h: (b, r, 0)),
            scratch_shapes=[pltpu.VMEM((tr, D), jnp.float32)]),
        compiler_params=pltpu.CompilerParams(
            dimension_semantics=("parallel", "parallel", "arbitrary"),
            vmem_limit_bytes=32 * 1024 * 1024),
    )(ctx, w_h, bias)


# ---------------------------------------------------------------------------
# Full forward (argument order (q, v, k, mask) mirrors the PyTorch module)
# ---------------------------------------------------------------------------
def mha_forward(q, v, k, mask, params, num_heads, *,
                block_q=None, block_kv=None, return_scores=False):
    B, S, D = q.shape
    assert D % num_heads == 0
    d_k = D // num_heads
    inv_sqrt_dk = 1.0 / math.sqrt(d_k)

    # Per-chip tile / VMEM budget: bigger q tiles on v5e/v6e (128 MiB VMEM),
    # conservative on v7x (64 MiB).
    vmem_cap = _vmem_capacity_bytes()
    if block_q is None:
        block_q = 512 if vmem_cap >= 100 * 1024 * 1024 else 256
    if block_kv is None:
        block_kv = 512
    flash_vmem = max(32 * 1024 * 1024,
                     min(96 * 1024 * 1024, vmem_cap * 3 // 4))

    # Per-head projection weights (head split folded into the weight layout);
    # the 1/sqrt(d_k) scale folded into W_q / b_q before the bf16 cast.
    def _split_w(w):                        # (D, D) -> (H, D, d_k)
        return w.reshape(D, num_heads, d_k).transpose(1, 0, 2)

    w_qkv = jnp.stack([_split_w(params["wq_t"] * inv_sqrt_dk),
                       _split_w(params["wk_t"]),
                       _split_w(params["wv_t"])]).astype(jnp.bfloat16)
    b_qkv = jnp.stack([(params["bq"] * inv_sqrt_dk).reshape(num_heads, 1, d_k),
                       params["bk"].reshape(num_heads, 1, d_k),
                       params["bv"].reshape(num_heads, 1, d_k)]).astype(jnp.float32)

    # Stage 1: Q/K/V projections, output already in (3, B, H, S, d_k).
    x = jnp.stack([q, k, v]).astype(jnp.bfloat16)     # bf16 stack: half the traffic
    qkvh = _qkv_projection(x, w_qkv, b_qkv)

    # Stage 2: flash attention (online softmax, masked-tile skipping).
    ctx, scores = _flash_attention(qkvh, mask, block_q=block_q,
                                   block_kv=block_kv,
                                   return_scores=return_scores,
                                   vmem_limit=flash_vmem)

    # Stage 3: output projection with the head merge fused in (lane-dense out).
    w_o = params["wo_t"].reshape(num_heads, d_k, D).astype(jnp.bfloat16)
    out = _output_projection(ctx, w_o, params["bo"].astype(jnp.float32),
                             out_dtype=jnp.float32)

    if return_scores:
        return out, scores
    return out


# ---------------------------------------------------------------------------
# Parameters & plain-JAX reference
# ---------------------------------------------------------------------------
def init_params(key, d_model):
    """nn.Linear-shaped params; weights stored pre-transposed as (in, out)."""
    bound = 1.0 / math.sqrt(d_model)
    ks = jax.random.split(key, 8)
    u = lambda kk, shape: jax.random.uniform(kk, shape, jnp.float32, -bound, bound)
    return {
        "wq_t": u(ks[0], (d_model, d_model)), "bq": u(ks[1], (1, d_model)),
        "wk_t": u(ks[2], (d_model, d_model)), "bk": u(ks[3], (1, d_model)),
        "wv_t": u(ks[4], (d_model, d_model)), "bv": u(ks[5], (1, d_model)),
        "wo_t": u(ks[6], (d_model, d_model)), "bo": u(ks[7], (1, d_model)),
    }


def reference_mha(q, v, k, mask, params, num_heads):
    """Plain-JAX f32 reference reproducing the PyTorch forward (dropout=0)."""
    B, S, D = q.shape
    d_k = D // num_heads
    Q = q @ params["wq_t"] + params["bq"]
    K = k @ params["wk_t"] + params["bk"]
    V = v @ params["wv_t"] + params["bv"]
    Qh = Q.reshape(B, S, num_heads, d_k).transpose(0, 2, 1, 3)
    Kh = K.reshape(B, S, num_heads, d_k).transpose(0, 2, 1, 3)
    Vh = V.reshape(B, S, num_heads, d_k).transpose(0, 2, 1, 3)
    scores = (Qh @ Kh.transpose(0, 1, 3, 2)) / math.sqrt(d_k)
    scores = jnp.where(mask[:, None, :, :] == 0, jnp.float32(-1e20), scores)
    attn = jax.nn.softmax(scores, axis=-1)
    x = attn @ Vh
    x = x.transpose(0, 2, 1, 3).reshape(B, S, D)
    return x @ params["wo_t"] + params["bo"], attn


# ---------------------------------------------------------------------------
if __name__ == "__main__":
    B, S, d_model, h = 2, 8, 32, 4   # d_model % h == 0

    key = jax.random.PRNGKey(0)
    kq, kv_in, kk, kp = jax.random.split(key, 4)

    q = jax.random.normal(kq, (B, S, d_model), jnp.float32)
    v = jax.random.normal(kv_in, (B, S, d_model), jnp.float32)
    k = jax.random.normal(kk, (B, S, d_model), jnp.float32)

    # causal mask (1 = keep, 0 = masked), broadcast per batch
    causal = jnp.tril(jnp.ones((S, S), jnp.int32))
    mask = jnp.broadcast_to(causal, (B, S, S))

    params = init_params(kp, d_model)

    # Fast path: no probability write-back.
    out = mha_forward(q, v, k, mask, params, h)
    out = jax.block_until_ready(out)

    # Debug path: also return attention probabilities (single KV tile).
    out2, attn = mha_forward(q, v, k, mask, params, h, return_scores=True)
    out2 = jax.block_until_ready(out2)
    attn = jax.block_until_ready(attn)

    ref_out, ref_attn = reference_mha(q, v, k, mask, params, h)

    assert out.shape == (B, S, d_model)
    assert attn.shape == (B, h, S, S)
    # bf16 matmul operands -> relaxed tolerances vs f32 reference
    assert jnp.allclose(out, ref_out, atol=5e-2, rtol=5e-2), "output mismatch"
    assert jnp.allclose(out2, ref_out, atol=5e-2, rtol=5e-2), "output mismatch (scores path)"
    assert jnp.allclose(attn.astype(jnp.float32), ref_attn,
                        atol=2e-2, rtol=2e-2), "attn mismatch"

    print("KERNEL_OK")
</pallas_src>

<mosaic_0001>
module attributes {stable_mosaic.version = 11 : i64} {
  func.func @_qkv_proj_kernel(%arg0: i32, %arg1: i32, %arg2: i32, %arg3: i32, %arg4: memref<1x1x8x32xbf16, #tpu.memory_space<vmem>>, %arg5: memref<1x1x32x8xbf16, #tpu.memory_space<vmem>>, %arg6: memref<1x1x1x8xf32, #tpu.memory_space<vmem>>, %arg7: memref<1x1x1x8x8xbf16, #tpu.memory_space<vmem>>) attributes {dimension_semantics = [#tpu.dimension_semantics<parallel>, #tpu.dimension_semantics<parallel>, #tpu.dimension_semantics<parallel>, #tpu.dimension_semantics<arbitrary>], iteration_bounds = array<i64: 3, 2, 1, 4>, scalar_prefetch = 0 : i64, scratch_operands = 0 : i64, tpu.core_type = #tpu.core_type<tc>, window_params = [{transform_indices = @transform_0, window_bounds = array<i64: 1, 1, 8, 32>}, {transform_indices = @transform_1, window_bounds = array<i64: 1, 1, 32, 8>}, {transform_indices = @transform_2, window_bounds = array<i64: 1, 1, 1, 8>}, {transform_indices = @transform_3, window_bounds = array<i64: 1, 1, 1, 8, 8>}]} {
    %c0 = arith.constant 0 : index
    %c0_0 = arith.constant 0 : index
    %c0_1 = arith.constant 0 : index
    %c0_2 = arith.constant 0 : index
    %0 = vector.load %arg4[%c0, %c0_0, %c0_1, %c0_2] : memref<1x1x8x32xbf16, #tpu.memory_space<vmem>>, vector<1x1x8x32xbf16>
    %1 = vector.shape_cast %0 : vector<1x1x8x32xbf16> to vector<8x32xbf16>
    %c0_3 = arith.constant 0 : index
    %c0_4 = arith.constant 0 : index
    %c0_5 = arith.constant 0 : index
    %c0_6 = arith.constant 0 : index
    %2 = vector.load %arg5[%c0_3, %c0_4, %c0_5, %c0_6] : memref<1x1x32x8xbf16, #tpu.memory_space<vmem>>, vector<1x1x32x8xbf16>
    %3 = vector.shape_cast %2 : vector<1x1x32x8xbf16> to vector<32x8xbf16>
    %cst = arith.constant dense<0.000000e+00> : vector<8x8xf32>
    %4 = tpu.matmul %1, %3, %cst {dimension_numbers = #tpu.dot_dimension_numbers<[1], [0], [0], [1], [0, 0, 1, 1], [], []>} : vector<8x32xbf16>, vector<32x8xbf16>, vector<8x8xf32> -> vector<8x8xf32>
    %c0_7 = arith.constant 0 : index
    %c0_8 = arith.constant 0 : index
    %c0_9 = arith.constant 0 : index
    %c0_10 = arith.constant 0 : index
    %5 = vector.load %arg6[%c0_7, %c0_8, %c0_9, %c0_10] : memref<1x1x1x8xf32, #tpu.memory_space<vmem>>, vector<1x1x1x8xf32>
    %6 = vector.shape_cast %5 : vector<1x1x1x8xf32> to vector<1x8xf32>
    %7 = vector.broadcast %6 : vector<1x8xf32> to vector<8x8xf32>
    %8 = arith.addf %4, %7 : vector<8x8xf32>
    %9 = arith.truncf %8 : vector<8x8xf32> to vector<8x8xbf16>
    %c0_11 = arith.constant 0 : index
    %c0_12 = arith.constant 0 : index
    %c0_13 = arith.constant 0 : index
    %c0_14 = arith.constant 0 : index
    %c0_15 = arith.constant 0 : index
    %10 = vector.load %arg7[%c0_11, %c0_12, %c0_13, %c0_14, %c0_15] : memref<1x1x1x8x8xbf16, #tpu.memory_space<vmem>>, vector<1x1x1x8x8xbf16>
    %11 = vector.shape_cast %10 : vector<1x1x1x8x8xbf16> to vector<8x8xbf16>
    %12 = vector.shape_cast %9 : vector<8x8xbf16> to vector<1x1x1x8x8xbf16>
    tpu.vector_store %arg7[%c0_11, %c0_12, %c0_13, %c0_14, %c0_15], %12 {strides = array<i32>} : memref<1x1x1x8x8xbf16, #tpu.memory_space<vmem>>, vector<1x1x1x8x8xbf16>,
    return
  }
  func.func @transform_0(%arg0: i32, %arg1: i32, %arg2: i32, %arg3: i32) -> (i32, i32, i32, i32) {
    %c0_i32 = arith.constant 0 : i32
    %c0_i32_0 = arith.constant 0 : i32
    return %arg0, %arg1, %arg2, %c0_i32 : i32, i32, i32, i32
  }
  func.func @transform_1(%arg0: i32, %arg1: i32, %arg2: i32, %arg3: i32) -> (i32, i32, i32, i32) {
    %c0_i32 = arith.constant 0 : i32
    %c0_i32_0 = arith.constant 0 : i32
    %c0_i32_1 = arith.constant 0 : i32
    return %arg0, %arg3, %c0_i32, %c0_i32_0 : i32, i32, i32, i32
  }
  func.func @transform_2(%arg0: i32, %arg1: i32, %arg2: i32, %arg3: i32) -> (i32, i32, i32, i32) {
    %c0_i32 = arith.constant 0 : i32
    %c0_i32_0 = arith.constant 0 : i32
    %c0_i32_1 = arith.constant 0 : i32
    return %arg0, %arg3, %c0_i32, %c0_i32_0 : i32, i32, i32, i32
  }
  func.func @transform_3(%arg0: i32, %arg1: i32, %arg2: i32, %arg3: i32) -> (i32, i32, i32, i32, i32) {
    %c0_i32 = arith.constant 0 : i32
    %c0_i32_0 = arith.constant 0 : i32
    return %arg0, %arg1, %arg3, %arg2, %c0_i32 : i32, i32, i32, i32, i32
  }
}

</mosaic_0001>

<llo_original>
// kernel: tpu_custom_call.1
$region0: #{tpu_custom_call.1}
  #allocation0 [shape = 'u32[]', space=smem, size = 0x4, offset = 0x4, fixed_abs, tag = 'smem constant byte address 0x4 - core index']
  #allocation1 [shape = 'u32[72,128]{1,0:T(1,128)}', space=vmem, size = 0x9000, scoped, tag = 'internal scratch']
  %s0 = inlined_call_operand.vmem [shape: bf16[3,2,8,32], index: 0, kind: input, shape index: {}]
  %s1 = inlined_call_operand.vmem [shape: bf16[3,4,32,8], index: 1, kind: input, shape index: {}]
  %s2 = inlined_call_operand.vmem [shape: f32[3,4,1,8], index: 2, kind: input, shape index: {}]
  %s3 = inlined_call_operand.hbm [shape: bf16[3,2,4,8,8], index: 3, kind: output, shape index: {}]
  %s4 = sld [smem:[#allocation0]]
  $region45: #{tpu_custom_call.1} parent=0
    _
  %s6 = ssub.s32 1, %s4
  %s7 = scalar_select 0, %s6, %s4
  $region1: #{tpu_custom_call.1} parent=0
    #allocation2 [shape = 'u8[4096]{0}', space=vmem, size = 0x1000, scoped, tag = 'output window, operand 0']
    #allocation3 [shape = 's32[2]{0}', space=sflag, size = 0x8, scoped, tag = 'scoped memory for tpu_custom_call.1']
    %8 = vsyncpa [#allocation3], 0
    %s9 = scalar_lea.sflag [#allocation3], 1
    %10 = vsyncpa %s9, 0
    loop: start=0, step=1, limit=26
    $region2: #{tpu_custom_call.1} parent=1 // loop_pre_header
      _
    $region3: #{tpu_custom_call.1} parent=1 // loop_header
      %s12 = sphi 0, %s16
      %p13 = scmp.ge.s32.totalorder %s12, 26
      %s19 = sphi 0, %s45
      %s20 = sphi 0, %s41
      %s21 = sphi 0, %s37
      %s22 = sphi 0, %s33
      %s23 = sphi 0, %s19
      %s24 = sphi 0, %s20
      %s25 = sphi 0, %s21
      %s26 = sphi 0, %s22
      %s27 = sphi 0, %s23
      %s28 = sphi 0, %s24
      %s29 = sphi 0, %s25
      %s30 = sphi 0, %s26
      %s52 = sphi 0, %s54
      %s55 = sphi 0, %s52
      %s56 = sphi 0, %s55
      %s72 = sphi 0, %s56
      %s80 = sphi 0, %s82
      %s83 = sphi 0, %s80
      %s84 = sphi 0, %s83
      %s100 = sphi 0, %s84
      %s108 = sphi 0, %s110
      %s111 = sphi 0, %s108
      %s112 = sphi 0, %s111
      %s128 = sphi 0, %s112
      %s140 = sphi 0, %s142
      %s143 = sphi 0, %s140
      %s144 = sphi 0, %s143
      %s160 = sphi 0, %s144
    $region4: #{tpu_custom_call.1} parent=1 // loop_header_branch
      %15 = sbr.rel (%p13) target = $region8
    $region5: #{tpu_custom_call.1} parent=1 // loop_body
      %s17 = ssub.s32 %s12, 1
      %s18 = ssub.s32 %s12, 2
      %s31 = sadd.s32 1, %s22
      %p32 = scmp.ge.s32.totalorder %s31, 4
      %s33 = scalar_select %p32, 0, %s31
      %s34 = sadd.s32 1, %s21
      %s35 = scalar_select %p32, %s34, %s21
      %p36 = scmp.ge.s32.totalorder %s35, 1
      %s37 = scalar_select %p36, 0, %s35
      %s38 = sadd.s32 1, %s20
      %s39 = scalar_select %p36, %s38, %s20
      %p40 = scmp.ge.s32.totalorder %s39, 2
      %s41 = scalar_select %p40, 0, %s39
      %s42 = sadd.s32 1, %s19
      %s43 = scalar_select %p40, %s42, %s19
      %p44 = scmp.ge.s32.totalorder %s43, 3
      %s45 = scalar_select %p44, 0, %s43
      %s46 = ssub.s32 %s19, %s45
      %s47 = ssub.s32 %s20, %s41
      %s48 = sor.u32 %s46, %s47
      %s49 = ssub.s32 %s21, %s37
      %s50 = sor.u32 %s48, %s49
      %p51 = scmp.eq.s32.totalorder %s50, 0
      %s53 = sadd.s32 %s52, 1
      %s54 = scalar_select %p51, %s52, %s53
      %p57 = pneg %p51
      %p58 = scmp.eq.s32.totalorder %s12, 23
      %p59 = por %p57, %p58
      %p60 = scmp.ne.s32.totalorder %s52, %s55
      %p61 = scmp.eq.s32.totalorder %s12, 0
      %p62 = por %p60, %p61
      %p63 = scmp.ne.s32.totalorder %s52, %s55
      %p64 = scmp.eq.s32.totalorder %s17, 23
      %p65 = por %p63, %p64
      %p66 = scmp.ne.s32.totalorder %s55, %s56
      %p67 = scmp.eq.s32.totalorder %s17, 0
      %p68 = por %p66, %p67
      %p69 = scmp.ne.s32.totalorder %s55, %s56
      %p70 = scmp.eq.s32.totalorder %s18, 23
      %p71 = por %p69, %p70
      %p73 = scmp.ne.s32.totalorder %s56, %s72
      %p74 = scmp.eq.s32.totalorder %s18, 0
      %p75 = por %p73, %p74
      %s76 = ssub.s32 %s19, %s45
      %s77 = ssub.s32 %s22, %s33
      %s78 = sor.u32 %s76, %s77
      %p79 = scmp.eq.s32.totalorder %s78, 0
      %s81 = sadd.s32 %s80, 1
      %s82 = scalar_select %p79, %s80, %s81
      %p85 = pneg %p79
      %p86 = scmp.eq.s32.totalorder %s12, 23
      %p87 = por %p85, %p86
      %p88 = scmp.ne.s32.totalorder %s80, %s83
      %p89 = scmp.eq.s32.totalorder %s12, 0
      %p90 = por %p88, %p89
      %p91 = scmp.ne.s32.totalorder %s80, %s83
      %p92 = scmp.eq.s32.totalorder %s17, 23
      %p93 = por %p91, %p92
      %p94 = scmp.ne.s32.totalorder %s83, %s84
      %p95 = scmp.eq.s32.totalorder %s17, 0
      %p96 = por %p94, %p95
      %p97 = scmp.ne.s32.totalorder %s83, %s84
      %p98 = scmp.eq.s32.totalorder %s18, 23
      %p99 = por %p97, %p98
      %p101 = scmp.ne.s32.totalorder %s84, %s100
      %p102 = scmp.eq.s32.totalorder %s18, 0
      %p103 = por %p101, %p102
      %s104 = ssub.s32 %s19, %s45
      %s105 = ssub.s32 %s22, %s33
      %s106 = sor.u32 %s104, %s105
      %p107 = scmp.eq.s32.totalorder %s106, 0
      %s109 = sadd.s32 %s108, 1
      %s110 = scalar_select %p107, %s108, %s109
      %p113 = pneg %p107
      %p114 = scmp.eq.s32.totalorder %s12, 23
      %p115 = por %p113, %p114
      %p116 = scmp.ne.s32.totalorder %s108, %s111
      %p117 = scmp.eq.s32.totalorder %s12, 0
      %p118 = por %p116, %p117
      %p119 = scmp.ne.s32.totalorder %s108, %s111
      %p120 = scmp.eq.s32.totalorder %s17, 23
      %p121 = por %p119, %p120
      %p122 = scmp.ne.s32.totalorder %s111, %s112
      %p123 = scmp.eq.s32.totalorder %s17, 0
      %p124 = por %p122, %p123
      %p125 = scmp.ne.s32.totalorder %s111, %s112
      %p126 = scmp.eq.s32.totalorder %s18, 23
      %p127 = por %p125, %p126
      %p129 = scmp.ne.s32.totalorder %s112, %s128
      %p130 = scmp.eq.s32.totalorder %s18, 0
      %p131 = por %p129, %p130
      %s132 = ssub.s32 %s19, %s45
      %s133 = ssub.s32 %s20, %s41
      %s134 = sor.u32 %s132, %s133
      %s135 = ssub.s32 %s22, %s33
      %s136 = sor.u32 %s134, %s135
      %s137 = ssub.s32 %s21, %s37
      %s138 = sor.u32 %s136, %s137
      %p139 = scmp.eq.s32.totalorder %s138, 0
      %s141 = sadd.s32 %s140, 1
      %s142 = scalar_select %p139, %s140, %s141
      %p145 = pneg %p139
      %p146 = scmp.eq.s32.totalorder %s12, 23
      %p147 = por %p145, %p146
      %p148 = scmp.ne.s32.totalorder %s140, %s143
      %p149 = scmp.eq.s32.totalorder %s12, 0
      %p150 = por %p148, %p149
      %p151 = scmp.ne.s32.totalorder %s140, %s143
      %p152 = scmp.eq.s32.totalorder %s17, 23
      %p153 = por %p151, %p152
      %p154 = scmp.ne.s32.totalorder %s143, %s144
      %p155 = scmp.eq.s32.totalorder %s17, 0
      %p156 = por %p154, %p155
      %p157 = scmp.ne.s32.totalorder %s143, %s144
      %p158 = scmp.eq.s32.totalorder %s18, 23
      %p159 = por %p157, %p158
      %p161 = scmp.ne.s32.totalorder %s144, %s160
      %p162 = scmp.eq.s32.totalorder %s18, 0
      %p163 = por %p161, %p162
      %p164 = scmp.le.s32.totalorder 1, %s12
      %p165 = scmp.lt.s32.totalorder %s12, 25
      %p166 = pnand %p164, %p165
      %p167 = pneg %p166
      // Predicated region
      $region9: #{tpu_custom_call.1} parent=5 // pred_check
        _
      $region10: #{tpu_custom_call.1} parent=5 // pred_check_branch
        %169 = sbr.rel (%p166) target = $region12
      $region11: #{tpu_custom_call.1} parent=5 // pred_region
        %s170 = ssub.s32 %s12, 1
      $region12: #{tpu_custom_call.1} parent=5 // pred_fallthru
        _
      %p171 = scmp.lt.s32.totalorder %s12, 24
      // Predicated region
      $region13: #{tpu_custom_call.1} parent=5 // pred_check
        %p172 = pneg %p171
      $region14: #{tpu_custom_call.1} parent=5 // pred_check_branch
        %174 = sbr.rel (%p172) target = $region16
      $region15: #{tpu_custom_call.1} parent=5 // pred_region
        // Predicated region
        $region17: #{tpu_custom_call.1} parent=15 // pred_check
          %p175 = pneg %p62
        $region18: #{tpu_custom_call.1} parent=15 // pred_check_branch
          %177 = sbr.rel (%p175) target = $region20
        $region19: #{tpu_custom_call.1} parent=15 // pred_region
          %p178 = scmp.lt.s32.totalorder %s19, 2
          %s179 = scalar_select %p178, %s19, 2
          %p180 = scmp.lt.s32.totalorder %s20, 1
          %s181 = scalar_select %p180, %s20, 1
          %p182 = scmp.lt.s32.totalorder %s21, 0
          %s183 = scalar_select %p182, %s21, 0
          %s184 = sadd.s32 %s183, %s181
          %s185 = smul.addr %s179, 2
          %s186 = sadd.s32 %s184, %s185
          %s187 = smul.addr %s186, 4
          %s188 = scalar_lea.vmem %s0, %s187
        $region20: #{tpu_custom_call.1} parent=15 // pred_fallthru
          _
        // Predicated region
        $region21: #{tpu_custom_call.1} parent=15 // pred_check
          %p189 = pneg %p90
        $region22: #{tpu_custom_call.1} parent=15 // pred_check_branch
          %191 = sbr.rel (%p189) target = $region24
        $region23: #{tpu_custom_call.1} parent=15 // pred_region
          %p192 = scmp.lt.s32.totalorder %s19, 2
          %s193 = scalar_select %p192, %s19, 2
          %p194 = scmp.lt.s32.totalorder %s22, 3
          %s195 = scalar_select %p194, %s22, 3
          %s196 = smul.addr %s195, 4
          %s197 = smul.addr %s193, 16
          %s198 = sadd.s32 %s196, %s197
          %s199 = smul.addr %s198, 4
          %s200 = scalar_lea.vmem %s1, %s199
        $region24: #{tpu_custom_call.1} parent=15 // pred_fallthru
          _
        // Predicated region
        $region25: #{tpu_custom_call.1} parent=15 // pred_check
          %p201 = pneg %p118
        $region26: #{tpu_custom_call.1} parent=15 // pred_check_branch
          %203 = sbr.rel (%p201) target = $region28
        $region27: #{tpu_custom_call.1} parent=15 // pred_region
          %p204 = scmp.lt.s32.totalorder %s19, 2
          %s205 = scalar_select %p204, %s19, 2
          %p206 = scmp.lt.s32.totalorder %s22, 3
          %s207 = scalar_select %p206, %s22, 3
          %s208 = smul.addr %s205, 4
          %s209 = sadd.s32 %s207, %s208
          %s210 = scalar_lea.vmem %s2, %s209
        $region28: #{tpu_custom_call.1} parent=15 // pred_fallthru
          _
      $region16: #{tpu_custom_call.1} parent=5 // pred_fallthru
        _
      %p211 = scmp.le.s32.totalorder 1, %s12
      %p212 = scmp.lt.s32.totalorder %s12, 25
      %p213 = pnand %p211, %p212
      %p214 = pneg %p213
      // Predicated region
      $region29: #{tpu_custom_call.1} parent=5 // pred_check
        _
      $region30: #{tpu_custom_call.1} parent=5 // pred_check_branch
        %216 = sbr.rel (%p213) target = $region32
      $region31: #{tpu_custom_call.1} parent=5 // pred_region
        %s217 = ssub.s32 %s12, 1
        %p218 = scmp.lt.s32.totalorder %s23, 2
        %s219 = scalar_select %p218, %s23, 2
        %p220 = scmp.lt.s32.totalorder %s24, 1
        %s221 = scalar_select %p220, %s24, 1
        %p222 = scmp.lt.s32.totalorder %s25, 0
        %s223 = scalar_select %p222, %s25, 0
        %s224 = sadd.s32 %s223, %s221
        %s225 = smul.addr %s219, 2
        %s226 = sadd.s32 %s224, %s225
        %s227 = smul.addr %s226, 4
        %s228 = scalar_lea.vmem %s0, %s227
        %p229 = pneg %p68
        %p230 = pneg %p65
        %p231 = scmp.lt.s32.totalorder %s23, 2
        %s232 = scalar_select %p231, %s23, 2
        %p233 = scmp.lt.s32.totalorder %s26, 3
        %s234 = scalar_select %p233, %s26, 3
        %s235 = smul.addr %s234, 4
        %s236 = smul.addr %s232, 16
        %s237 = sadd.s32 %s235, %s236
        %s238 = smul.addr %s237, 4
        %s239 = scalar_lea.vmem %s1, %s238
        %p240 = pneg %p96
        %p241 = pneg %p93
        %p242 = scmp.lt.s32.totalorder %s23, 2
        %s243 = scalar_select %p242, %s23, 2
        %p244 = scmp.lt.s32.totalorder %s26, 3
        %s245 = scalar_select %p244, %s26, 3
        %s246 = smul.addr %s243, 4
        %s247 = sadd.s32 %s245, %s246
        %s248 = scalar_lea.vmem %s2, %s247
        %p249 = pneg %p124
        %p250 = pneg %p121
        %p251 = pneg %p156
        %p252 = pneg %p153
        %s253 = sand.u32 %s143, 1
        %s254 = scalar_lea.sflag [#allocation3], %s253
        %s255 = sand.u32 %s143, 1
        %s256 = smul.addr %s255, 4
        %s257 = scalar_lea.vmem [#allocation2], %s256
        %p258 = scmp.lt.s32.totalorder %s23, 2
        %s259 = scalar_select %p258, %s23, 2
        %p260 = scmp.lt.s32.totalorder %s24, 1
        %s261 = scalar_select %p260, %s24, 1
        %p262 = scmp.lt.s32.totalorder %s25, 0
        %s263 = scalar_select %p262, %s25, 0
        %s264 = sadd.s32 %s263, %s261
        %s265 = smul.addr %s259, 2
        %s266 = sadd.s32 %s264, %s265
        %s267 = smul.addr %s266, 4
        %s268 = scalar_lea.vmem %s0, %s267
        %p269 = scmp.lt.s32.totalorder %s23, 2
        %s270 = scalar_select %p269, %s23, 2
        %p271 = scmp.lt.s32.totalorder %s26, 3
        %s272 = scalar_select %p271, %s26, 3
        %s273 = smul.addr %s272, 4
        %s274 = smul.addr %s270, 16
        %s275 = sadd.s32 %s273, %s274
        %s276 = smul.addr %s275, 4
        %s277 = scalar_lea.vmem %s1, %s276
        %p278 = scmp.lt.s32.totalorder %s23, 2
        %s279 = scalar_select %p278, %s23, 2
        %p280 = scmp.lt.s32.totalorder %s26, 3
        %s281 = scalar_select %p280, %s26, 3
        %s282 = smul.addr %s279, 4
        %s283 = sadd.s32 %s281, %s282
        %s284 = scalar_lea.vmem %s2, %s283
        %v286 = vld [vmem:[%s268] sm:$0xf]
        %v287 = vld [vmem:[%s277] sm:$0xf]
        %v288 = vld [vmem:[%s277 + $0x4] sm:$0xf]
        %v289 = vld [vmem:[%s277 + $0x8] sm:$0xf]
        %v290 = vld [vmem:[%s277 + $0xc] sm:$0xf]
        %v291 = vld [vmem:[%s284] sm:$0x1]
        %v293 = vperm.slane %v291, 0
        %v299 = vunpack.c.l.b16 %v287
        %v300 = vunpack.c.l.b16 %v288
        %v301 = vunpack.c.l.b16 %v289
        %v302 = vunpack.c.l.b16 %v290
        %v303 = vpack.c.b16 %v300, %v299
        %v304 = vpack.c.b16 %v302, %v301
        %vm307 = vcmask 261120
        %v309 = vsel %vm307, %v286, 0
        %311 = vmatpush.bf16.msra.mxu0 0
        %312 = vmatpush.bf16.msra.mxu0 0
        %313 = vmatpush.bf16.msra.mxu0 0
        %314 = vmatpush.bf16.msra.mxu0 0
        %315 = vmatpush.bf16.msra.mxu0 0
        %316 = vmatpush.bf16.msra.mxu0 0
        %317 = vmatpush.bf16.msra.mxu0 %v304
        %318 = vmatpush.bf16.msra.mxu0 %v303
        %319 = vmatmul.bf16.gmra.mxu0 %v309
        %v320 = vpop.f32.mrf.mxu0
        %v321 = vadd.f32 %v293, %v320
        %v322 = vpop.f32.mrf.mxu0
        %323 = vdwg.mxu0
        %v324 = vpack.c.bf16 %v321, %v321
        %vm325 = vcmask 60416
        %326 = vst.msk [vmem:[%s257] sm:$0xf] %vm325, %v324
        %s327 = sand.u32 %s143, 1
        %s328 = scalar_lea.sflag [#allocation3], %s327
        %s329 = sand.u32 %s143, 1
        %s330 = smul.addr %s329, 4
        %s331 = scalar_lea.vmem [#allocation2], %s330
        // Predicated region
        $region33: #{tpu_custom_call.1} parent=31 // pred_check
          %p332 = pneg %p153
        $region34: #{tpu_custom_call.1} parent=31 // pred_check_branch
          %334 = sbr.rel (%p332) target = $region36
        $region35: #{tpu_custom_call.1} parent=31 // pred_region
          %336 = vsyncadd %s328, 0
          %s337 = sadd.s32 %s25, %s26
          %s338 = smul.addr %s24, 4
          %s339 = sadd.s32 %s337, %s338
          %s340 = smul.addr %s23, 8
          %s341 = sadd.s32 %s339, %s340
          %s342 = smul.addr %s341, 4
          %s343 = scalar_lea.hbm %s3, %s342
          %s345 = sshll.u32 %s331, 4
          %s346 = int_to_ptr.vmem [resolvable:$true] %s345
          %s347 = sshll.u32 %s343, 4
          %s348 = int_to_ptr.hbm [resolvable:$true] %s347
          %350 = dma.vmem_to_hbm [thread:$0]  %s346, 64, %s348, %s328
        $region36: #{tpu_custom_call.1} parent=31 // pred_fallthru
          _
      $region32: #{tpu_custom_call.1} parent=5 // pred_fallthru
        _
      %p351 = scmp.le.s32.totalorder 2, %s12
      // Predicated region
      $region37: #{tpu_custom_call.1} parent=5 // pred_check
        %p352 = pneg %p351
      $region38: #{tpu_custom_call.1} parent=5 // pred_check_branch
        %354 = sbr.rel (%p352) target = $region40
      $region39: #{tpu_custom_call.1} parent=5 // pred_region
        %s355 = ssub.s32 %s12, 2
        // Predicated region
        $region41: #{tpu_custom_call.1} parent=39 // pred_check
          %p356 = pneg %p159
        $region42: #{tpu_custom_call.1} parent=39 // pred_check_branch
          %358 = sbr.rel (%p356) target = $region44
        $region43: #{tpu_custom_call.1} parent=39 // pred_region
          %s359 = sand.u32 %s144, 1
          %s360 = scalar_lea.sflag [#allocation3], %s359
          %s361 = sand.u32 %s144, 1
          %s362 = smul.addr %s361, 4
          %s363 = scalar_lea.vmem [#allocation2], %s362
          %365 = dma.done %s360, 64
        $region44: #{tpu_custom_call.1} parent=39 // pred_fallthru
          _
      $region40: #{tpu_custom_call.1} parent=5 // pred_fallthru
        _
    $region6: #{tpu_custom_call.1} parent=1 // loop_footer
      %s16 = sadd.s32 1, %s12
    $region7: #{tpu_custom_call.1} parent=1 // loop_footer_branch
      %11 = sbr.rel target = $region3
    $region8: #{tpu_custom_call.1} parent=1 // loop_exit
      _
    %366 = vsyncpa [#allocation3], 1
    %s367 = scalar_lea.sflag [#allocation3], 1
    %368 = vsyncpa %s367, 1

</llo_original>
